<compile_context>
chip_gen: v7x
topology: tpu7x:2x2x1
jax: 0.10.0
libtpu: 0.0.40
codegen_flags: <defaults>
</compile_context>

<pallas_src>
import functools
import math

import jax
import jax.numpy as jnp
from jax import lax
from jax.experimental import pallas as pl
from jax.experimental.pallas import tpu as pltpu

LN_EPS = 1e-5


def _layernorm_f32(x, gamma, beta):
    x = x.astype(jnp.float32)
    mu = jnp.mean(x, axis=-1, keepdims=True)
    var = jnp.mean((x - mu) ** 2, axis=-1, keepdims=True)
    return (x - mu) * lax.rsqrt(var + LN_EPS) * gamma + beta


def _gelu_exact(x):
    # matches torch.nn.GELU() default (erf formulation), computed in f32
    return 0.5 * x * (1.0 + lax.erf(x * (1.0 / math.sqrt(2.0))))


# ---------------------------------------------------------------------------
# Kernel A (per layer): LayerNorm1 + fused QKV projection, once per token.
#   Grid (B, N // TILE), both axes parallel.
#   One wide matmul xn (T, D) @ Wqkv (D, 3*H*Dh); head split via lane slices,
#   outputs written per-head as (B, H, N, Dh) bf16 so the attention kernel never
#   re-slices or re-projects keys/values per query tile.
#   Note: the 1/sqrt(Dh) scale is pre-folded into the Wq columns.
# ---------------------------------------------------------------------------
def ln1_qkv_kernel(x_ref, g_ref, b_ref, wqkv_ref, q_ref, k_ref, v_ref, *,
                   heads, dim_head):
    cdt = wqkv_ref.dtype                      # bf16 compute/storage dtype
    inner = heads * dim_head

    xn = _layernorm_f32(x_ref[0],
                        g_ref[...].astype(jnp.float32),
                        b_ref[...].astype(jnp.float32)).astype(cdt)     # (T, D)
    # single wide MXU matmul, f32 accumulation
    qkv = jnp.dot(xn, wqkv_ref[...],
                  preferred_element_type=jnp.float32).astype(cdt)       # (T, 3*H*Dh)

    def to_heads(base):                        # (T, H*Dh) lane block -> (H, T, Dh)
        return jnp.stack(
            [qkv[:, base + h * dim_head: base + (h + 1) * dim_head]
             for h in range(heads)], axis=0)

    q_ref[0] = to_heads(0)
    k_ref[0] = to_heads(inner)
    v_ref[0] = to_heads(2 * inner)


# ---------------------------------------------------------------------------
# Kernel B (per layer): attention + out-proj + residual + LN2 + FF1 + FF2 + residual.
#   Grid (B, N // TQ), both axes parallel. Q/K/V arrive precomputed (bf16, per-head).
#   Scores are computed one head at a time -> only a single (TQ, N) f32 score buffer
#   lives in VMEM; per-head outputs are concatenated to (TQ, H*Dh) and the head sum of
#   the output projection happens inside one wide MXU matmul against Wo (H*Dh, D).
# ---------------------------------------------------------------------------
def attn_ff_kernel(q_ref, k_ref, v_ref, x_ref, mask_ref,
                   wo_ref, bo_ref, ln2_g_ref, ln2_b_ref,
                   w1_ref, b1_ref, w2_ref, b2_ref,
                   xnew_ref, out_ref, *, heads, dim_head):
    del dim_head
    cdt = k_ref.dtype                          # bf16
    x_res = x_ref[0].astype(jnp.float32)       # (TQ, D) residual tile
    mask = mask_ref[0].astype(jnp.float32)     # (1, N) additive key mask

    # ---- per-head attention (single (TQ, N) f32 score buffer at a time) ----
    o_heads = []
    for h in range(heads):
        q_h = q_ref[0, h]                      # (TQ, Dh) bf16 (scale folded into Wq)
        k_h = k_ref[0, h]                      # (N,  Dh) bf16
        v_h = v_ref[0, h]                      # (N,  Dh) bf16
        s = lax.dot_general(q_h, k_h, (((1,), (1,)), ((), ())),
                            preferred_element_type=jnp.float32)         # (TQ, N) f32
        s = s + mask
        s = s - jnp.max(s, axis=-1, keepdims=True)
        p = jnp.exp(s)
        # approx reciprocal (~1e-3 rel err) is well below bf16 resolution; exact-parity
        # users should replace with a true divide.
        p = p * pl.reciprocal(jnp.sum(p, axis=-1, keepdims=True), approx=True)
        o_heads.append(jnp.dot(p.astype(cdt), v_h,
                               preferred_element_type=jnp.float32).astype(cdt))
    o = jnp.concatenate(o_heads, axis=-1)      # (TQ, H*Dh) bf16, head-major columns

    # ---- output projection (head sum fused into the MXU) + residual --------
    attn = jnp.dot(o, wo_ref[...], preferred_element_type=jnp.float32)  # (TQ, D) f32
    x_new = attn + bo_ref[...].astype(jnp.float32) + x_res
    xnew_ref[0] = x_new.astype(xnew_ref.dtype)

    # ---- LayerNorm2 -> FF1 (GELU) -> FF2 (GELU) -> +residual ----------------
    xn2 = _layernorm_f32(x_new,
                         ln2_g_ref[...].astype(jnp.float32),
                         ln2_b_ref[...].astype(jnp.float32)).astype(cdt)
    h1 = jnp.dot(xn2, w1_ref[...],
                 preferred_element_type=jnp.float32) + b1_ref[...].astype(jnp.float32)
    h1 = _gelu_exact(h1).astype(cdt)
    h2 = jnp.dot(h1, w2_ref[...],
                 preferred_element_type=jnp.float32) + b2_ref[...].astype(jnp.float32)
    h2 = _gelu_exact(h2)
    out_ref[0] = (h2 + x_new).astype(out_ref.dtype)


# ---------------------------------------------------------------------------
# VMEM-aware tile selection (budget sized conservatively for v7x's 64 MiB VMEM)
# ---------------------------------------------------------------------------
def _attn_ff_vmem_bytes(N, TQ, H, Dh, D, M):
    bf, f32 = 2, 4
    inner = H * Dh
    kv = 2 * 2 * H * N * Dh * bf                       # K, V blocks (double-buffered)
    qx = 2 * (H * TQ * Dh + TQ * D) * bf               # Q tile + residual tile
    outs = 2 * 2 * TQ * D * bf                         # two outputs (double-buffered)
    wts = 2 * (inner * D + D * M + M * D + 2 * M + 5 * D) * bf
    scores = 2 * TQ * N * f32                          # one head in flight (+ slack)
    inter = (TQ * inner + TQ * M + 6 * TQ * D) * f32   # concat / FF / LN intermediates
    return kv + qx + outs + wts + scores + inter


def _pick_q_tile(N, H, Dh, D, M, budget_bytes=40 << 20):
    # prefer multiples of 16 (bf16 sublane tile); 8 only as a last resort
    cands = [c for c in (512, 256, 128, 64, 32, 16, 8) if c <= N and N % c == 0]
    if not cands:
        return N
    for c in cands:
        if _attn_ff_vmem_bytes(N, c, H, Dh, D, M) <= budget_bytes:
            return c
    return cands[-1]


# ---------------------------------------------------------------------------
# Wrappers
# ---------------------------------------------------------------------------
def _ln1_qkv(x, p, *, heads, dim_head, tile, vmem_limit):
    B, N, D = x.shape
    H, Dh = heads, dim_head
    kernel = functools.partial(ln1_qkv_kernel, heads=heads, dim_head=dim_head)
    hshape = jax.ShapeDtypeStruct((B, H, N, Dh), x.dtype)
    return pl.pallas_call(
        kernel,
        out_shape=(hshape, hshape, hshape),
        grid=(B, N // tile),
        in_specs=[
            pl.BlockSpec((1, tile, D), lambda b, t: (b, t, 0)),         # x tile
            pl.BlockSpec((1, D), lambda b, t: (0, 0)),                  # ln1 gamma
            pl.BlockSpec((1, D), lambda b, t: (0, 0)),                  # ln1 beta
            pl.BlockSpec((D, 3 * H * Dh), lambda b, t: (0, 0)),         # Wqkv (fused)
        ],
        out_specs=(pl.BlockSpec((1, H, tile, Dh), lambda b, t: (b, 0, t, 0)),
                   pl.BlockSpec((1, H, tile, Dh), lambda b, t: (b, 0, t, 0)),
                   pl.BlockSpec((1, H, tile, Dh), lambda b, t: (b, 0, t, 0))),
        compiler_params=pltpu.CompilerParams(
            dimension_semantics=("parallel", "parallel"),
            vmem_limit_bytes=vmem_limit),
    )(x, p["ln1_g"], p["ln1_b"], p["wqkv"])


def _attn_ff(q, k, v, x, add_mask, p, *, heads, dim_head, q_tile, vmem_limit):
    B, N, D = x.shape
    H, Dh = heads, dim_head
    inner = H * Dh
    M = p["w1"].shape[1]
    kernel = functools.partial(attn_ff_kernel, heads=heads, dim_head=dim_head)
    return pl.pallas_call(
        kernel,
        out_shape=(jax.ShapeDtypeStruct((B, N, D), x.dtype),   # x_new (residual stream)
                   jax.ShapeDtypeStruct((B, N, D), x.dtype)),  # out   (FF branch)
        grid=(B, N // q_tile),
        in_specs=[
            pl.BlockSpec((1, H, q_tile, Dh), lambda b, t: (b, 0, t, 0)),  # Q tile
            pl.BlockSpec((1, H, N, Dh), lambda b, t: (b, 0, 0, 0)),       # K (full seq)
            pl.BlockSpec((1, H, N, Dh), lambda b, t: (b, 0, 0, 0)),       # V (full seq)
            pl.BlockSpec((1, q_tile, D), lambda b, t: (b, t, 0)),         # residual tile
            pl.BlockSpec((1, 1, N), lambda b, t: (b, 0, 0)),              # additive mask
            pl.BlockSpec((inner, D), lambda b, t: (0, 0)),                # Wo
            pl.BlockSpec((1, D), lambda b, t: (0, 0)),                    # bo
            pl.BlockSpec((1, D), lambda b, t: (0, 0)),                    # ln2 gamma
            pl.BlockSpec((1, D), lambda b, t: (0, 0)),                    # ln2 beta
            pl.BlockSpec((D, M), lambda b, t: (0, 0)),                    # W1
            pl.BlockSpec((1, M), lambda b, t: (0, 0)),                    # b1
            pl.BlockSpec((M, D), lambda b, t: (0, 0)),                    # W2
            pl.BlockSpec((1, D), lambda b, t: (0, 0)),                    # b2
        ],
        out_specs=(pl.BlockSpec((1, q_tile, D), lambda b, t: (b, t, 0)),
                   pl.BlockSpec((1, q_tile, D), lambda b, t: (b, t, 0))),
        compiler_params=pltpu.CompilerParams(
            dimension_semantics=("parallel", "parallel"),
            vmem_limit_bytes=vmem_limit),
    )(q, k, v, x, add_mask,
      p["wo"], p["bo"], p["ln2_g"], p["ln2_b"],
      p["w1"], p["b1"], p["w2"], p["b2"])


def self_attention_transformer(x, pad_mask, layer_params, *, heads, dim_head,
                               compute_dtype=jnp.bfloat16, q_tile=None):
    """Mirrors the PyTorch forward exactly (including the FF-not-carried quirk)."""
    B, N, D = x.shape
    M = layer_params[0]["w1"].shape[1]
    if q_tile is None:
        q_tile = _pick_q_tile(N, heads, dim_head, D, M)
    assert N % q_tile == 0
    est = _attn_ff_vmem_bytes(N, q_tile, heads, dim_head, D, M)
    vmem_limit = int(min(56 << 20, max(32 << 20, int(1.25 * est))))

    # additive key mask: 0 where valid, -1e9 where padded; shape (B, 1, N), f32
    add_mask = jnp.where(pad_mask, -1e9, 0.0).astype(jnp.float32)[:, None, :]
    x = x.astype(compute_dtype)
    out = x
    for p in layer_params:
        q, k, v = _ln1_qkv(x, p, heads=heads, dim_head=dim_head,
                           tile=q_tile, vmem_limit=vmem_limit)
        x, out = _attn_ff(q, k, v, x, add_mask, p, heads=heads, dim_head=dim_head,
                          q_tile=q_tile, vmem_limit=vmem_limit)
    return out


# ---------------------------------------------------------------------------
# Parameters: torch-layout raw init + one-time repack (fused Wqkv, bf16 cast,
# 1/sqrt(Dh) folded into the Wq columns)
# ---------------------------------------------------------------------------
def init_raw_params(key, depth, dim, mlp_dim, heads, dim_head):
    inner = heads * dim_head
    layers = []
    for _ in range(depth):
        ks = jax.random.split(key, 6)
        key = ks[0]
        layers.append(dict(
            ln1_g=jnp.ones((1, dim), jnp.float32),
            ln1_b=jnp.zeros((1, dim), jnp.float32),
            wqkv=0.02 * jax.random.normal(ks[1], (dim, 3 * inner), jnp.float32),
            wo=0.02 * jax.random.normal(ks[2], (inner, dim), jnp.float32),
            bo=jnp.zeros((1, dim), jnp.float32),
            ln2_g=jnp.ones((1, dim), jnp.float32),
            ln2_b=jnp.zeros((1, dim), jnp.float32),
            w1=0.02 * jax.random.normal(ks[3], (dim, mlp_dim), jnp.float32),
            b1=0.02 * jax.random.normal(ks[4], (1, mlp_dim), jnp.float32),
            w2=0.02 * jax.random.normal(ks[5], (mlp_dim, dim), jnp.float32),
            b2=jnp.zeros((1, dim), jnp.float32),
        ))
    return layers


def prepare_layer_params(raw, heads, dim_head, compute_dtype=jnp.bfloat16):
    """One-time repack outside the kernels: fuse [Wq*scale | Wk | Wv] into a single
    (D, 3*H*Dh) bf16 matrix (head-major columns per block) and cast matmul weights to
    bf16. LayerNorm params and biases stay f32 (added on the f32 elementwise path)."""
    scale = dim_head ** -0.5
    wq, wk, wv = jnp.split(raw["wqkv"], 3, axis=1)          # each (D, H*Dh)
    wqkv = jnp.concatenate([wq * scale, wk, wv], axis=1).astype(compute_dtype)
    return dict(
        ln1_g=raw["ln1_g"].astype(jnp.float32),
        ln1_b=raw["ln1_b"].astype(jnp.float32),
        wqkv=wqkv,
        wo=raw["wo"].astype(compute_dtype),                  # (H*Dh, D), head-major rows
        bo=raw["bo"].astype(jnp.float32),
        ln2_g=raw["ln2_g"].astype(jnp.float32),
        ln2_b=raw["ln2_b"].astype(jnp.float32),
        w1=raw["w1"].astype(compute_dtype), b1=raw["b1"].astype(jnp.float32),
        w2=raw["w2"].astype(compute_dtype), b2=raw["b2"].astype(jnp.float32),
    )


if __name__ == "__main__":
    # small shapes consistent with the module
    B, N = 2, 8
    dim, mlp_dim, depth, heads, dim_head = 32, 64, 2, 4, 8
    # TODO(synk): dropout and torch.utils.checkpoint have no eval-time effect; implemented as identity.

    key = jax.random.PRNGKey(0)
    kx, kp = jax.random.split(key)
    x = jax.random.normal(kx, (B, N, dim), jnp.float32)
    # pad_mask: True = padded token (last two tokens of batch element 1 are padding)
    pad_mask = jnp.zeros((B, N), dtype=bool).at[1, -2:].set(True)

    raw_params = init_raw_params(kp, depth, dim, mlp_dim, heads, dim_head)
    params = [prepare_layer_params(p, heads, dim_head) for p in raw_params]

    out = self_attention_transformer(x, pad_mask, params, heads=heads, dim_head=dim_head)
    out = jax.block_until_ready(out)
    assert out.shape == (B, N, dim)
    assert bool(jnp.all(jnp.isfinite(out.astype(jnp.float32))))
    print("KERNEL_OK")
</pallas_src>

<mosaic_0001>
module attributes {stable_mosaic.version = 11 : i64} {
  func.func @ln1_qkv_kernel(%arg0: i32, %arg1: i32, %arg2: memref<1x8x32xbf16, #tpu.memory_space<vmem>>, %arg3: memref<1x32xf32, #tpu.memory_space<vmem>>, %arg4: memref<1x32xf32, #tpu.memory_space<vmem>>, %arg5: memref<32x96xbf16, #tpu.memory_space<vmem>>, %arg6: memref<1x4x8x8xbf16, #tpu.memory_space<vmem>>, %arg7: memref<1x4x8x8xbf16, #tpu.memory_space<vmem>>, %arg8: memref<1x4x8x8xbf16, #tpu.memory_space<vmem>>) attributes {dimension_semantics = [#tpu.dimension_semantics<parallel>, #tpu.dimension_semantics<parallel>], iteration_bounds = array<i64: 2, 1>, scalar_prefetch = 0 : i64, scratch_operands = 0 : i64, tpu.core_type = #tpu.core_type<tc>, window_params = [{transform_indices = @transform_0, window_bounds = array<i64: 1, 8, 32>}, {pipeline_mode = #tpu.pipeline_mode<synchronous>, transform_indices = @transform_1, window_bounds = array<i64: 1, 32>}, {pipeline_mode = #tpu.pipeline_mode<synchronous>, transform_indices = @transform_2, window_bounds = array<i64: 1, 32>}, {pipeline_mode = #tpu.pipeline_mode<synchronous>, transform_indices = @transform_3, window_bounds = array<i64: 32, 96>}, {transform_indices = @transform_4, window_bounds = array<i64: 1, 4, 8, 8>}, {transform_indices = @transform_5, window_bounds = array<i64: 1, 4, 8, 8>}, {transform_indices = @transform_6, window_bounds = array<i64: 1, 4, 8, 8>}]} {
    %c0 = arith.constant 0 : index
    %c0_0 = arith.constant 0 : index
    %c0_1 = arith.constant 0 : index
    %0 = vector.load %arg2[%c0, %c0_0, %c0_1] : memref<1x8x32xbf16, #tpu.memory_space<vmem>>, vector<1x8x32xbf16>
    %1 = vector.shape_cast %0 : vector<1x8x32xbf16> to vector<8x32xbf16>
    %c0_2 = arith.constant 0 : index
    %c0_3 = arith.constant 0 : index
    %2 = vector.load %arg3[%c0_2, %c0_3] : memref<1x32xf32, #tpu.memory_space<vmem>>, vector<1x32xf32>
    %c0_4 = arith.constant 0 : index
    %c0_5 = arith.constant 0 : index
    %3 = vector.load %arg4[%c0_4, %c0_5] : memref<1x32xf32, #tpu.memory_space<vmem>>, vector<1x32xf32>
    %4 = arith.extf %1 : vector<8x32xbf16> to vector<8x32xf32>
    %cst = arith.constant dense<0.000000e+00> : vector<8xf32>
    %5 = vector.multi_reduction <add>, %4, %cst [1] : vector<8x32xf32> to vector<8xf32>
    %6 = vector.shape_cast %5 : vector<8xf32> to vector<8x1xf32>
    %cst_6 = arith.constant 3.200000e+01 : f32
    %7 = vector.broadcast %cst_6 : f32 to vector<8x1xf32>
    %8 = arith.divf %6, %7 : vector<8x1xf32>
    %9 = vector.broadcast %8 : vector<8x1xf32> to vector<8x32xf32>
    %10 = arith.subf %4, %9 : vector<8x32xf32>
    %11 = arith.mulf %10, %10 : vector<8x32xf32>
    %cst_7 = arith.constant dense<0.000000e+00> : vector<8xf32>
    %12 = vector.multi_reduction <add>, %11, %cst_7 [1] : vector<8x32xf32> to vector<8xf32>
    %13 = vector.shape_cast %12 : vector<8xf32> to vector<8x1xf32>
    %cst_8 = arith.constant 3.200000e+01 : f32
    %14 = vector.broadcast %cst_8 : f32 to vector<8x1xf32>
    %15 = arith.divf %13, %14 : vector<8x1xf32>
    %16 = vector.broadcast %8 : vector<8x1xf32> to vector<8x32xf32>
    %17 = arith.subf %4, %16 : vector<8x32xf32>
    %cst_9 = arith.constant 9.99999974E-6 : f32
    %18 = vector.broadcast %cst_9 : f32 to vector<8x1xf32>
    %19 = arith.addf %15, %18 : vector<8x1xf32>
    %20 = math.rsqrt %19 : vector<8x1xf32>
    %21 = vector.broadcast %20 : vector<8x1xf32> to vector<8x32xf32>
    %22 = arith.mulf %17, %21 : vector<8x32xf32>
    %23 = vector.broadcast %2 : vector<1x32xf32> to vector<8x32xf32>
    %24 = arith.mulf %22, %23 : vector<8x32xf32>
    %25 = vector.broadcast %3 : vector<1x32xf32> to vector<8x32xf32>
    %26 = arith.addf %24, %25 : vector<8x32xf32>
    %27 = arith.truncf %26 : vector<8x32xf32> to vector<8x32xbf16>
    %c0_10 = arith.constant 0 : index
    %c0_11 = arith.constant 0 : index
    %28 = vector.load %arg5[%c0_10, %c0_11] : memref<32x96xbf16, #tpu.memory_space<vmem>>, vector<32x96xbf16>
    %cst_12 = arith.constant dense<0.000000e+00> : vector<8x96xf32>
    %29 = tpu.matmul %27, %28, %cst_12 {dimension_numbers = #tpu.dot_dimension_numbers<[1], [0], [0], [1], [0, 0, 1, 1], [], []>} : vector<8x32xbf16>, vector<32x96xbf16>, vector<8x96xf32> -> vector<8x96xf32>
    %30 = arith.truncf %29 : vector<8x96xf32> to vector<8x96xbf16>
    %31 = vector.extract_strided_slice %30 {offsets = [0, 0], sizes = [8, 8], strides = [1, 1]} : vector<8x96xbf16> to vector<8x8xbf16>
    %32 = vector.extract_strided_slice %30 {offsets = [0, 8], sizes = [8, 8], strides = [1, 1]} : vector<8x96xbf16> to vector<8x8xbf16>
    %33 = vector.extract_strided_slice %30 {offsets = [0, 16], sizes = [8, 8], strides = [1, 1]} : vector<8x96xbf16> to vector<8x8xbf16>
    %34 = vector.extract_strided_slice %30 {offsets = [0, 24], sizes = [8, 8], strides = [1, 1]} : vector<8x96xbf16> to vector<8x8xbf16>
    %35 = vector.shape_cast %31 : vector<8x8xbf16> to vector<1x8x8xbf16>
    %36 = vector.shape_cast %32 : vector<8x8xbf16> to vector<1x8x8xbf16>
    %37 = vector.shape_cast %33 : vector<8x8xbf16> to vector<1x8x8xbf16>
    %38 = vector.shape_cast %34 : vector<8x8xbf16> to vector<1x8x8xbf16>
    %39 = tpu.concatenate %35, %36, %37, %38 in 0 : vector<1x8x8xbf16>, vector<1x8x8xbf16>, vector<1x8x8xbf16>, vector<1x8x8xbf16> -> vector<4x8x8xbf16>
    %c0_13 = arith.constant 0 : index
    %c0_14 = arith.constant 0 : index
    %c0_15 = arith.constant 0 : index
    %c0_16 = arith.constant 0 : index
    %40 = vector.load %arg6[%c0_13, %c0_14, %c0_15, %c0_16] : memref<1x4x8x8xbf16, #tpu.memory_space<vmem>>, vector<1x4x8x8xbf16>
    %41 = vector.shape_cast %40 : vector<1x4x8x8xbf16> to vector<4x8x8xbf16>
    %42 = vector.shape_cast %39 : vector<4x8x8xbf16> to vector<1x4x8x8xbf16>
    tpu.vector_store %arg6[%c0_13, %c0_14, %c0_15, %c0_16], %42 {strides = array<i32>} : memref<1x4x8x8xbf16, #tpu.memory_space<vmem>>, vector<1x4x8x8xbf16>,
    %43 = vector.extract_strided_slice %30 {offsets = [0, 32], sizes = [8, 8], strides = [1, 1]} : vector<8x96xbf16> to vector<8x8xbf16>
    %44 = vector.extract_strided_slice %30 {offsets = [0, 40], sizes = [8, 8], strides = [1, 1]} : vector<8x96xbf16> to vector<8x8xbf16>
    %45 = vector.extract_strided_slice %30 {offsets = [0, 48], sizes = [8, 8], strides = [1, 1]} : vector<8x96xbf16> to vector<8x8xbf16>
    %46 = vector.extract_strided_slice %30 {offsets = [0, 56], sizes = [8, 8], strides = [1, 1]} : vector<8x96xbf16> to vector<8x8xbf16>
    %47 = vector.shape_cast %43 : vector<8x8xbf16> to vector<1x8x8xbf16>
    %48 = vector.shape_cast %44 : vector<8x8xbf16> to vector<1x8x8xbf16>
    %49 = vector.shape_cast %45 : vector<8x8xbf16> to vector<1x8x8xbf16>
    %50 = vector.shape_cast %46 : vector<8x8xbf16> to vector<1x8x8xbf16>
    %51 = tpu.concatenate %47, %48, %49, %50 in 0 : vector<1x8x8xbf16>, vector<1x8x8xbf16>, vector<1x8x8xbf16>, vector<1x8x8xbf16> -> vector<4x8x8xbf16>
    %c0_17 = arith.constant 0 : index
    %c0_18 = arith.constant 0 : index
    %c0_19 = arith.constant 0 : index
    %c0_20 = arith.constant 0 : index
    %52 = vector.load %arg7[%c0_17, %c0_18, %c0_19, %c0_20] : memref<1x4x8x8xbf16, #tpu.memory_space<vmem>>, vector<1x4x8x8xbf16>
    %53 = vector.shape_cast %52 : vector<1x4x8x8xbf16> to vector<4x8x8xbf16>
    %54 = vector.shape_cast %51 : vector<4x8x8xbf16> to vector<1x4x8x8xbf16>
    tpu.vector_store %arg7[%c0_17, %c0_18, %c0_19, %c0_20], %54 {strides = array<i32>} : memref<1x4x8x8xbf16, #tpu.memory_space<vmem>>, vector<1x4x8x8xbf16>,
    %55 = vector.extract_strided_slice %30 {offsets = [0, 64], sizes = [8, 8], strides = [1, 1]} : vector<8x96xbf16> to vector<8x8xbf16>
    %56 = vector.extract_strided_slice %30 {offsets = [0, 72], sizes = [8, 8], strides = [1, 1]} : vector<8x96xbf16> to vector<8x8xbf16>
    %57 = vector.extract_strided_slice %30 {offsets = [0, 80], sizes = [8, 8], strides = [1, 1]} : vector<8x96xbf16> to vector<8x8xbf16>
    %58 = vector.extract_strided_slice %30 {offsets = [0, 88], sizes = [8, 8], strides = [1, 1]} : vector<8x96xbf16> to vector<8x8xbf16>
    %59 = vector.shape_cast %55 : vector<8x8xbf16> to vector<1x8x8xbf16>
    %60 = vector.shape_cast %56 : vector<8x8xbf16> to vector<1x8x8xbf16>
    %61 = vector.shape_cast %57 : vector<8x8xbf16> to vector<1x8x8xbf16>
    %62 = vector.shape_cast %58 : vector<8x8xbf16> to vector<1x8x8xbf16>
    %63 = tpu.concatenate %59, %60, %61, %62 in 0 : vector<1x8x8xbf16>, vector<1x8x8xbf16>, vector<1x8x8xbf16>, vector<1x8x8xbf16> -> vector<4x8x8xbf16>
    %c0_21 = arith.constant 0 : index
    %c0_22 = arith.constant 0 : index
    %c0_23 = arith.constant 0 : index
    %c0_24 = arith.constant 0 : index
    %64 = vector.load %arg8[%c0_21, %c0_22, %c0_23, %c0_24] : memref<1x4x8x8xbf16, #tpu.memory_space<vmem>>, vector<1x4x8x8xbf16>
    %65 = vector.shape_cast %64 : vector<1x4x8x8xbf16> to vector<4x8x8xbf16>
    %66 = vector.shape_cast %63 : vector<4x8x8xbf16> to vector<1x4x8x8xbf16>
    tpu.vector_store %arg8[%c0_21, %c0_22, %c0_23, %c0_24], %66 {strides = array<i32>} : memref<1x4x8x8xbf16, #tpu.memory_space<vmem>>, vector<1x4x8x8xbf16>,
    return
  }
  func.func @transform_0(%arg0: i32, %arg1: i32) -> (i32, i32, i32) {
    %c0_i32 = arith.constant 0 : i32
    %c0_i32_0 = arith.constant 0 : i32
    return %arg0, %arg1, %c0_i32 : i32, i32, i32
  }
  func.func @transform_1(%arg0: i32, %arg1: i32) -> (i32, i32) {
    %c0_i32 = arith.constant 0 : i32
    %c0_i32_0 = arith.constant 0 : i32
    %c0_i32_1 = arith.constant 0 : i32
    return %c0_i32, %c0_i32_0 : i32, i32
  }
  func.func @transform_2(%arg0: i32, %arg1: i32) -> (i32, i32) {
    %c0_i32 = arith.constant 0 : i32
    %c0_i32_0 = arith.constant 0 : i32
    %c0_i32_1 = arith.constant 0 : i32
    return %c0_i32, %c0_i32_0 : i32, i32
  }
  func.func @transform_3(%arg0: i32, %arg1: i32) -> (i32, i32) {
    %c0_i32 = arith.constant 0 : i32
    %c0_i32_0 = arith.constant 0 : i32
    %c0_i32_1 = arith.constant 0 : i32
    return %c0_i32, %c0_i32_0 : i32, i32
  }
  func.func @transform_4(%arg0: i32, %arg1: i32) -> (i32, i32, i32, i32) {
    %c0_i32 = arith.constant 0 : i32
    %c0_i32_0 = arith.constant 0 : i32
    %c0_i32_1 = arith.constant 0 : i32
    return %arg0, %c0_i32, %arg1, %c0_i32_0 : i32, i32, i32, i32
  }
  func.func @transform_5(%arg0: i32, %arg1: i32) -> (i32, i32, i32, i32) {
    %c0_i32 = arith.constant 0 : i32
    %c0_i32_0 = arith.constant 0 : i32
    %c0_i32_1 = arith.constant 0 : i32
    return %arg0, %c0_i32, %arg1, %c0_i32_0 : i32, i32, i32, i32
  }
  func.func @transform_6(%arg0: i32, %arg1: i32) -> (i32, i32, i32, i32) {
    %c0_i32 = arith.constant 0 : i32
    %c0_i32_0 = arith.constant 0 : i32
    %c0_i32_1 = arith.constant 0 : i32
    return %arg0, %c0_i32, %arg1, %c0_i32_0 : i32, i32, i32, i32
  }
}

</mosaic_0001>

<llo_original>
// kernel: tpu_custom_call.1
$region0: #{tpu_custom_call.1}
  #allocation0 [shape = 'u32[]', space=smem, size = 0x4, offset = 0x4, fixed_abs, tag = 'smem constant byte address 0x4 - core index']
  #allocation1 [shape = 'u32[144,128]{1,0:T(1,128)}', space=vmem, size = 0x12000, scoped, tag = 'internal scratch']
  %s0 = inlined_call_operand.hbm [shape: bf16[2,8,32], index: 0, kind: input, shape index: {}]
  %s1 = inlined_call_operand.vmem [shape: f32[1,32], index: 1, kind: input, shape index: {}]
  %s2 = inlined_call_operand.vmem [shape: f32[1,32], index: 2, kind: input, shape index: {}]
  %s3 = inlined_call_operand.hbm [shape: bf16[32,96], index: 3, kind: input, shape index: {}]
  %s4 = inlined_call_operand.hbm [shape: bf16[2,4,8,8], index: 4, kind: output, shape index: {0}]
  %s5 = inlined_call_operand.hbm [shape: bf16[2,4,8,8], index: 5, kind: output, shape index: {1}]
  %s6 = inlined_call_operand.hbm [shape: bf16[2,4,8,8], index: 6, kind: output, shape index: {2}]
  %7 = xla_tuple %s4, %s5, %s6
  %s8 = sld [smem:[#allocation0]]
  $region73: #{tpu_custom_call.1} parent=0
    _
  %s10 = ssub.s32 1, %s8
  %s11 = scalar_select 0, %s10, %s8
  $region1: #{tpu_custom_call.1} parent=0
    #allocation2 [shape = 'u8[4096]{0}', space=vmem, size = 0x1000, scoped, tag = 'input window, operand 0']
    #allocation3 [shape = 's32[2]{0}', space=sflag, size = 0x8, scoped, tag = 'scoped memory for tpu_custom_call.1']
    #allocation4 [shape = 's32[2]{0}', space=sflag, size = 0x8, scoped, tag = 'scoped memory for tpu_custom_call.1']
    #allocation5 [shape = 'u8[8192]{0}', space=vmem, size = 0x2000, scoped, tag = 'input window, operand 3, single buffered']
    #allocation6 [shape = 's32[1]{0}', space=sflag, size = 0x4, scoped, tag = 'scoped memory for tpu_custom_call.1']
    #allocation7 [shape = 'u8[16384]{0}', space=vmem, size = 0x4000, scoped, tag = 'output window, operand 0']
    #allocation8 [shape = 'u8[16384]{0}', space=vmem, size = 0x4000, scoped, tag = 'output window, operand 1']
    #allocation9 [shape = 's32[2]{0}', space=sflag, size = 0x8, scoped, tag = 'scoped memory for tpu_custom_call.1']
    #allocation10 [shape = 'u8[16384]{0}', space=vmem, size = 0x4000, scoped, tag = 'output window, operand 2']
    %12 = vsyncpa [#allocation3], 0
    %s13 = scalar_lea.sflag [#allocation3], 1
    %14 = vsyncpa %s13, 0
    %15 = vsyncpa [#allocation6], 0
    %16 = vsyncpa [#allocation4], 0
    %s17 = scalar_lea.sflag [#allocation4], 1
    %18 = vsyncpa %s17, 0
    %19 = vsyncpa [#allocation9], 0
    %s20 = scalar_lea.sflag [#allocation9], 1
    %21 = vsyncpa %s20, 0
    loop: start=0, step=1, limit=4
    $region2: #{tpu_custom_call.1} parent=1 // loop_pre_header
      _
    $region3: #{tpu_custom_call.1} parent=1 // loop_header
      %s23 = sphi 0, %s27
      %p24 = scmp.ge.s32.totalorder %s23, 4
      %s30 = sphi 0, %s42
      %s31 = sphi 0, %s38
      %s32 = sphi 0, %s30
      %s33 = sphi 0, %s31
      %s34 = sphi 0, %s32
      %s35 = sphi 0, %s33
      %s47 = sphi 0, %s49
      %s50 = sphi 0, %s47
      %s51 = sphi 0, %s50
      %s67 = sphi 0, %s51
      %s71 = sphi 0, %s71
      %s73 = sphi 0, %s71
      %s74 = sphi 0, %s73
      %s88 = sphi 0, %s74
      %s92 = sphi 0, %s92
      %s94 = sphi 0, %s92
      %s95 = sphi 0, %s94
      %s109 = sphi 0, %s95
      %s113 = sphi 0, %s113
      %s115 = sphi 0, %s113
      %s116 = sphi 0, %s115
      %s130 = sphi 0, %s116
      %s138 = sphi 0, %s140
      %s141 = sphi 0, %s138
      %s142 = sphi 0, %s141
      %s158 = sphi 0, %s142
      %s166 = sphi 0, %s168
      %s169 = sphi 0, %s166
      %s170 = sphi 0, %s169
      %s186 = sphi 0, %s170
      %s194 = sphi 0, %s196
      %s197 = sphi 0, %s194
      %s198 = sphi 0, %s197
      %s214 = sphi 0, %s198
    $region4: #{tpu_custom_call.1} parent=1 // loop_header_branch
      %26 = sbr.rel (%p24) target = $region8
    $region5: #{tpu_custom_call.1} parent=1 // loop_body
      %s28 = ssub.s32 %s23, 1
      %s29 = ssub.s32 %s23, 2
      %s36 = sadd.s32 1, %s31
      %p37 = scmp.ge.s32.totalorder %s36, 1
      %s38 = scalar_select %p37, 0, %s36
      %s39 = sadd.s32 1, %s30
      %s40 = scalar_select %p37, %s39, %s30
      %p41 = scmp.ge.s32.totalorder %s40, 2
      %s42 = scalar_select %p41, 0, %s40
      %s43 = ssub.s32 %s30, %s42
      %s44 = ssub.s32 %s31, %s38
      %s45 = sor.u32 %s43, %s44
      %p46 = scmp.eq.s32.totalorder %s45, 0
      %s48 = sadd.s32 %s47, 1
      %s49 = scalar_select %p46, %s47, %s48
      %p52 = pneg %p46
      %p53 = scmp.eq.s32.totalorder %s23, 1
      %p54 = por %p52, %p53
      %p55 = scmp.ne.s32.totalorder %s47, %s50
      %p56 = scmp.eq.s32.totalorder %s23, 0
      %p57 = por %p55, %p56
      %p58 = scmp.ne.s32.totalorder %s47, %s50
      %p59 = scmp.eq.s32.totalorder %s28, 1
      %p60 = por %p58, %p59
      %p61 = scmp.ne.s32.totalorder %s50, %s51
      %p62 = scmp.eq.s32.totalorder %s28, 0
      %p63 = por %p61, %p62
      %p64 = scmp.ne.s32.totalorder %s50, %s51
      %p65 = scmp.eq.s32.totalorder %s29, 1
      %p66 = por %p64, %p65
      %p68 = scmp.ne.s32.totalorder %s51, %s67
      %p69 = scmp.eq.s32.totalorder %s29, 0
      %p70 = por %p68, %p69
      %s72 = sadd.s32 %s71, 1
      %p75 = scmp.eq.s32.totalorder %s23, 1
      %p76 = scmp.ne.s32.totalorder %s71, %s73
      %p77 = scmp.eq.s32.totalorder %s23, 0
      %p78 = por %p76, %p77
      %p79 = scmp.ne.s32.totalorder %s71, %s73
      %p80 = scmp.eq.s32.totalorder %s28, 1
      %p81 = por %p79, %p80
      %p82 = scmp.ne.s32.totalorder %s73, %s74
      %p83 = scmp.eq.s32.totalorder %s28, 0
      %p84 = por %p82, %p83
      %p85 = scmp.ne.s32.totalorder %s73, %s74
      %p86 = scmp.eq.s32.totalorder %s29, 1
      %p87 = por %p85, %p86
      %p89 = scmp.ne.s32.totalorder %s74, %s88
      %p90 = scmp.eq.s32.totalorder %s29, 0
      %p91 = por %p89, %p90
      %s93 = sadd.s32 %s92, 1
      %p96 = scmp.eq.s32.totalorder %s23, 1
      %p97 = scmp.ne.s32.totalorder %s92, %s94
      %p98 = scmp.eq.s32.totalorder %s23, 0
      %p99 = por %p97, %p98
      %p100 = scmp.ne.s32.totalorder %s92, %s94
      %p101 = scmp.eq.s32.totalorder %s28, 1
      %p102 = por %p100, %p101
      %p103 = scmp.ne.s32.totalorder %s94, %s95
      %p104 = scmp.eq.s32.totalorder %s28, 0
      %p105 = por %p103, %p104
      %p106 = scmp.ne.s32.totalorder %s94, %s95
      %p107 = scmp.eq.s32.totalorder %s29, 1
      %p108 = por %p106, %p107
      %p110 = scmp.ne.s32.totalorder %s95, %s109
      %p111 = scmp.eq.s32.totalorder %s29, 0
      %p112 = por %p110, %p111
      %s114 = sadd.s32 %s113, 1
      %p117 = scmp.eq.s32.totalorder %s23, 1
      %p118 = scmp.ne.s32.totalorder %s113, %s115
      %p119 = scmp.eq.s32.totalorder %s23, 0
      %p120 = por %p118, %p119
      %p121 = scmp.ne.s32.totalorder %s113, %s115
      %p122 = scmp.eq.s32.totalorder %s28, 1
      %p123 = por %p121, %p122
      %p124 = scmp.ne.s32.totalorder %s115, %s116
      %p125 = scmp.eq.s32.totalorder %s28, 0
      %p126 = por %p124, %p125
      %p127 = scmp.ne.s32.totalorder %s115, %s116
      %p128 = scmp.eq.s32.totalorder %s29, 1
      %p129 = por %p127, %p128
      %p131 = scmp.ne.s32.totalorder %s116, %s130
      %p132 = scmp.eq.s32.totalorder %s29, 0
      %p133 = por %p131, %p132
      %s134 = ssub.s32 %s30, %s42
      %s135 = ssub.s32 %s31, %s38
      %s136 = sor.u32 %s134, %s135
      %p137 = scmp.eq.s32.totalorder %s136, 0
      %s139 = sadd.s32 %s138, 1
      %s140 = scalar_select %p137, %s138, %s139
      %p143 = pneg %p137
      %p144 = scmp.eq.s32.totalorder %s23, 1
      %p145 = por %p143, %p144
      %p146 = scmp.ne.s32.totalorder %s138, %s141
      %p147 = scmp.eq.s32.totalorder %s23, 0
      %p148 = por %p146, %p147
      %p149 = scmp.ne.s32.totalorder %s138, %s141
      %p150 = scmp.eq.s32.totalorder %s28, 1
      %p151 = por %p149, %p150
      %p152 = scmp.ne.s32.totalorder %s141, %s142
      %p153 = scmp.eq.s32.totalorder %s28, 0
      %p154 = por %p152, %p153
      %p155 = scmp.ne.s32.totalorder %s141, %s142
      %p156 = scmp.eq.s32.totalorder %s29, 1
      %p157 = por %p155, %p156
      %p159 = scmp.ne.s32.totalorder %s142, %s158
      %p160 = scmp.eq.s32.totalorder %s29, 0
      %p161 = por %p159, %p160
      %s162 = ssub.s32 %s30, %s42
      %s163 = ssub.s32 %s31, %s38
      %s164 = sor.u32 %s162, %s163
      %p165 = scmp.eq.s32.totalorder %s164, 0
      %s167 = sadd.s32 %s166, 1
      %s168 = scalar_select %p165, %s166, %s167
      %p171 = pneg %p165
      %p172 = scmp.eq.s32.totalorder %s23, 1
      %p173 = por %p171, %p172
      %p174 = scmp.ne.s32.totalorder %s166, %s169
      %p175 = scmp.eq.s32.totalorder %s23, 0
      %p176 = por %p174, %p175
      %p177 = scmp.ne.s32.totalorder %s166, %s169
      %p178 = scmp.eq.s32.totalorder %s28, 1
      %p179 = por %p177, %p178
      %p180 = scmp.ne.s32.totalorder %s169, %s170
      %p181 = scmp.eq.s32.totalorder %s28, 0
      %p182 = por %p180, %p181
      %p183 = scmp.ne.s32.totalorder %s169, %s170
      %p184 = scmp.eq.s32.totalorder %s29, 1
      %p185 = por %p183, %p184
      %p187 = scmp.ne.s32.totalorder %s170, %s186
      %p188 = scmp.eq.s32.totalorder %s29, 0
      %p189 = por %p187, %p188
      %s190 = ssub.s32 %s30, %s42
      %s191 = ssub.s32 %s31, %s38
      %s192 = sor.u32 %s190, %s191
      %p193 = scmp.eq.s32.totalorder %s192, 0
      %s195 = sadd.s32 %s194, 1
      %s196 = scalar_select %p193, %s194, %s195
      %p199 = pneg %p193
      %p200 = scmp.eq.s32.totalorder %s23, 1
      %p201 = por %p199, %p200
      %p202 = scmp.ne.s32.totalorder %s194, %s197
      %p203 = scmp.eq.s32.totalorder %s23, 0
      %p204 = por %p202, %p203
      %p205 = scmp.ne.s32.totalorder %s194, %s197
      %p206 = scmp.eq.s32.totalorder %s28, 1
      %p207 = por %p205, %p206
      %p208 = scmp.ne.s32.totalorder %s197, %s198
      %p209 = scmp.eq.s32.totalorder %s28, 0
      %p210 = por %p208, %p209
      %p211 = scmp.ne.s32.totalorder %s197, %s198
      %p212 = scmp.eq.s32.totalorder %s29, 1
      %p213 = por %p211, %p212
      %p215 = scmp.ne.s32.totalorder %s198, %s214
      %p216 = scmp.eq.s32.totalorder %s29, 0
      %p217 = por %p215, %p216
      %p218 = scmp.le.s32.totalorder 1, %s23
      %p219 = scmp.lt.s32.totalorder %s23, 3
      %p220 = pnand %p218, %p219
      %p221 = pneg %p220
      // Predicated region
      $region9: #{tpu_custom_call.1} parent=5 // pred_check
        _
      $region10: #{tpu_custom_call.1} parent=5 // pred_check_branch
        %223 = sbr.rel (%p220) target = $region12
      $region11: #{tpu_custom_call.1} parent=5 // pred_region
        %s224 = ssub.s32 %s23, 1
        // Predicated region
        $region13: #{tpu_custom_call.1} parent=11 // pred_check
          %p225 = pneg %p84
        $region14: #{tpu_custom_call.1} parent=11 // pred_check_branch
          %227 = sbr.rel (%p225) target = $region16
        $region15: #{tpu_custom_call.1} parent=11 // pred_region
          _
        $region16: #{tpu_custom_call.1} parent=11 // pred_fallthru
          _
        // Predicated region
        $region17: #{tpu_custom_call.1} parent=11 // pred_check
          %p228 = pneg %p105
        $region18: #{tpu_custom_call.1} parent=11 // pred_check_branch
          %230 = sbr.rel (%p228) target = $region20
        $region19: #{tpu_custom_call.1} parent=11 // pred_region
          _
        $region20: #{tpu_custom_call.1} parent=11 // pred_fallthru
          _
        // Predicated region
        $region21: #{tpu_custom_call.1} parent=11 // pred_check
          %p231 = pneg %p126
        $region22: #{tpu_custom_call.1} parent=11 // pred_check_branch
          %233 = sbr.rel (%p231) target = $region24
        $region23: #{tpu_custom_call.1} parent=11 // pred_region
          %s235 = ssub.s32 256, 256
          %236 = vsyncadd [#allocation6], %s235
          %s237 = sshll.u32 [#allocation5], 4
          %s238 = int_to_ptr.vmem [resolvable:$true] %s237
          %243 = dma.hbm_to_vmem [thread:$0]  %s3, 256, %s238, [#allocation6], 64, 64, 4
        $region24: #{tpu_custom_call.1} parent=11 // pred_fallthru
          _
      $region12: #{tpu_custom_call.1} parent=5 // pred_fallthru
        _
      %p244 = scmp.lt.s32.totalorder %s23, 2
      // Predicated region
      $region25: #{tpu_custom_call.1} parent=5 // pred_check
        %p245 = pneg %p244
      $region26: #{tpu_custom_call.1} parent=5 // pred_check_branch
        %247 = sbr.rel (%p245) target = $region28
      $region27: #{tpu_custom_call.1} parent=5 // pred_region
        // Predicated region
        $region29: #{tpu_custom_call.1} parent=27 // pred_check
          %p248 = pneg %p57
        $region30: #{tpu_custom_call.1} parent=27 // pred_check_branch
          %250 = sbr.rel (%p248) target = $region32
        $region31: #{tpu_custom_call.1} parent=27 // pred_region
          %s251 = sand.u32 %s47, 1
          %s252 = scalar_lea.sflag [#allocation3], %s251
          %s253 = sand.u32 %s47, 1
          %s254 = smul.addr %s253, 4
          %s255 = scalar_lea.vmem [#allocation2], %s254
          %s257 = ssub.s32 64, 64
          %258 = vsyncadd %s252, %s257
          %s259 = sadd.s32 %s31, %s30
          %s260 = smul.addr %s259, 64
          %s261 = scalar_lea.hbm %s0, %s260
          %s263 = sshll.u32 %s255, 4
          %s264 = int_to_ptr.vmem [resolvable:$true] %s263
          %266 = dma.hbm_to_vmem [thread:$0]  %s261, 64, %s264, %s252
        $region32: #{tpu_custom_call.1} parent=27 // pred_fallthru
          _
      $region28: #{tpu_custom_call.1} parent=5 // pred_fallthru
        _
      %p267 = scmp.le.s32.totalorder 1, %s23
      %p268 = scmp.lt.s32.totalorder %s23, 3
      %p269 = pnand %p267, %p268
      %p270 = pneg %p269
      // Predicated region
      $region33: #{tpu_custom_call.1} parent=5 // pred_check
        _
      $region34: #{tpu_custom_call.1} parent=5 // pred_check_branch
        %272 = sbr.rel (%p269) target = $region36
      $region35: #{tpu_custom_call.1} parent=5 // pred_region
        %s273 = ssub.s32 %s23, 1
        %s274 = sand.u32 %s50, 1
        %s275 = scalar_lea.sflag [#allocation3], %s274
        %s276 = sand.u32 %s50, 1
        %s277 = smul.addr %s276, 4
        %s278 = scalar_lea.vmem [#allocation2], %s277
        // Predicated region
        $region37: #{tpu_custom_call.1} parent=35 // pred_check
          %p279 = pneg %p63
        $region38: #{tpu_custom_call.1} parent=35 // pred_check_branch
          %281 = sbr.rel (%p279) target = $region40
        $region39: #{tpu_custom_call.1} parent=35 // pred_region
          %282 = dma.done %s275, 64
        $region40: #{tpu_custom_call.1} parent=35 // pred_fallthru
          _
        // Predicated region
        $region41: #{tpu_custom_call.1} parent=35 // pred_check
          %p283 = pneg %p126
        $region42: #{tpu_custom_call.1} parent=35 // pred_check_branch
          %285 = sbr.rel (%p283) target = $region44
        $region43: #{tpu_custom_call.1} parent=35 // pred_region
          %286 = dma.done [#allocation6], 256
        $region44: #{tpu_custom_call.1} parent=35 // pred_fallthru
          _
        %s287 = sand.u32 %s50, 1
        %s288 = scalar_lea.sflag [#allocation3], %s287
        %s289 = sand.u32 %s50, 1
        %s290 = smul.addr %s289, 4
        %s291 = scalar_lea.vmem [#allocation2], %s290
        %p292 = pneg %p63
        %p293 = pneg %p60
        %p294 = pneg %p84
        %p295 = pneg %p81
        %p296 = pneg %p105
        %p297 = pneg %p102
        %p298 = pneg %p126
        %p299 = pneg %p123
        %p300 = pneg %p154
        %p301 = pneg %p151
        %s302 = sand.u32 %s141, 1
        %s303 = scalar_lea.sflag [#allocation4], %s302
        %s304 = sand.u32 %s141, 1
        %s305 = smul.addr %s304, 16
        %s306 = scalar_lea.vmem [#allocation7], %s305
        %p307 = pneg %p182
        %p308 = pneg %p179
        %s309 = sand.u32 %s28, 1
        %s310 = scalar_lea.sflag [#allocation9], %s309
        %s311 = sand.u32 %s169, 1
        %s312 = smul.addr %s311, 16
        %s313 = scalar_lea.vmem [#allocation8], %s312
        %p314 = pneg %p210
        %p315 = pneg %p207
        %s316 = sand.u32 %s28, 1
        %s317 = scalar_lea.sflag [#allocation9], %s316
        %s318 = sand.u32 %s197, 1
        %s319 = smul.addr %s318, 16
        %s320 = scalar_lea.vmem [#allocation10], %s319
        %v322 = vld [vmem:[%s278] sm:$0xf]
        %v323 = vld [vmem:[%s1] sm:$0x1]
        %v324 = vld [vmem:[%s2] sm:$0x1]
        %v325 = vunpack.c.l.bf16 %v322
        %vm326 = vcmask 261120
        %v327 = vsel %vm326, %v325, 0.0
        %328 = vadd.xlane.f32.xlu0 %v327
        %v329 = vpop.xlane.xlu0 %328
        %v330 = vrcp.pop 32.0
        %v331 = vmul.f32 %v329, %v330
        %v332 = vsub.f32 %v325, %v331
        %v333 = vmul.f32 %v332, %v332
        %v334 = vsel %vm326, %v333, 0.0
        %335 = vadd.xlane.f32.xlu0 %v334
        %v336 = vpop.xlane.xlu0 %335
        %v337 = vmul.f32 %v336, %v330
        %v338 = vadd.f32 %v337, 1e-05
        %v339 = vrsqrt.pop %v338
        %v340 = vmul.f32 %v332, %v339
        %v342 = vlaneseq
        %v343 = vshrl.u32 %v342, 7
        %v344 = vsub.s32 0, %v343
        %v345 = vrot.slane %v323, %v344
        %v347 = vmul.f32 %v340, %v345
        %v349 = vlaneseq
        %v350 = vshrl.u32 %v349, 7
        %v351 = vsub.s32 0, %v350
        %v352 = vrot.slane %v324, %v351
        %v354 = vadd.f32 %v347, %v352
        %v355 = vpack.c.bf16 %v354, %v354
        %v356 = vld [vmem:[#allocation5] sm:$0xf]
        %v357 = vld [vmem:[#allocation5 + $0x4] sm:$0xf]
        %v358 = vld [vmem:[#allocation5 + $0x8] sm:$0xf]
        %v359 = vld [vmem:[#allocation5 + $0xc] sm:$0xf]
        %v364 = vunpack.c.l.b16 %v356
        %v365 = vunpack.c.l.b16 %v357
        %v366 = vunpack.c.l.b16 %v358
        %v367 = vunpack.c.l.b16 %v359
        %v368 = vpack.c.b16 %v365, %v364
        %v369 = vpack.c.b16 %v367, %v366
        %v373 = vsel %vm326, %v355, 0
        %375 = vmatprep.subr.bf16.mxu0 0
        %376 = vmatpush1.bf16.msra.mxu0 %v368
        %377 = vmatprep.subr.bf16.mxu0 0
        %378 = vmatpush1.bf16.msra.mxu0 %v369
        %379 = vmatprep.subr.bf16.mxu0 0
        %380 = vmatpush1.bf16.msra.mxu0 0
        %381 = vmatprep.subr.bf16.mxu0 0
        %382 = vmatpush1.bf16.msra.mxu0 0
        %383 = vmatprep.subr.bf16.mxu0 0
        %384 = vmatpush1.bf16.msra.mxu0 0
        %385 = vmatprep.subr.bf16.mxu0 0
        %386 = vmatpush1.bf16.msra.mxu0 0
        %387 = vmatprep.subr.bf16.mxu0 0
        %388 = vmatpush1.bf16.msra.mxu0 0
        %389 = vmatprep.subr.bf16.mxu0 0
        %390 = vmatpush1.bf16.msra.mxu0 0
        %391 = vmatprep.subr.bf16.mxu0 0
        %392 = vmatpush1.bf16.msra.mxu0 0
        %393 = vmatprep.subr.bf16.mxu0 0
        %394 = vmatpush1.bf16.msra.mxu0 0
        %395 = vmatprep.subr.bf16.mxu0 0
        %396 = vmatpush1.bf16.msra.mxu0 0
        %397 = vmatprep.subr.bf16.mxu0 0
        %398 = vmatpush1.bf16.msra.mxu0 0
        %399 = vmatprep.subr.bf16.mxu0 0
        %400 = vmatpush1.bf16.msra.mxu0 0
        %401 = vmatprep.subr.bf16.mxu0 0
        %402 = vmatpush1.bf16.msra.mxu0 0
        %403 = vmatprep.subr.bf16.mxu0 0
        %404 = vmatpush1.bf16.msra.mxu0 0
        %405 = vmatprep.subr.bf16.mxu0 0
        %406 = vmatpush1.bf16.msra.mxu0 0
        %407 = vmatprep.mubr.bf16.mxu0 0
        %408 = vmatmul.mubr.bf16.gmra.mrb[0].mxu0 %v373
        %v409 = vpop.f32.mrb[0].mxu0
        %v410 = vadd.f32 0.0, %v409
        %v411 = vpop.f32.mrb[0].mxu0
        %v412 = vpop.f32.mrb[0].mxu0
        %v413 = vpop.f32.mrb[0].mxu0
        %414 = vdwg.mxu0
        %v415 = vpack.c.bf16 %v410, %v410
        %417 = vrot.lane.b32.xlu0 %v415, 120
        %v418 = vpop.permute.xlu0 %417
        %420 = vrot.lane.b32.xlu0 %v415, 112
        %v421 = vpop.permute.xlu0 %420
        %423 = vrot.lane.b32.xlu0 %v415, 104
        %v424 = vpop.permute.xlu0 %423
        %vm426 = vcmask 60416
        %427 = vst.msk [vmem:[%s306] sm:$0xf] %vm426, %v415
        %428 = vst.msk [vmem:[%s306 + $0x4] sm:$0xf] %vm426, %v418
        %429 = vst.msk [vmem:[%s306 + $0x8] sm:$0xf] %vm426, %v421
        %430 = vst.msk [vmem:[%s306 + $0xc] sm:$0xf] %vm426, %v424
        %v431 = vunpack.c.l.b16 %v415
        %v432 = vunpack.c.l.b16 %v418
        %v433 = vunpack.c.l.b16 %v421
        %v434 = vunpack.c.l.b16 %v424
        %v435 = vpack.c.b16 %v431, %v431
        %v436 = vpack.c.b16 %v432, %v432
        %v437 = vpack.c.b16 %v433, %v433
        %v438 = vpack.c.b16 %v434, %v434
        %439 = vrot.lane.b32.xlu0 %v435, 96
        %v440 = vpop.permute.xlu0 %439
        %441 = vrot.lane.b32.xlu0 %v436, 96
        %v442 = vpop.permute.xlu0 %441
        %443 = vrot.lane.b32.xlu0 %v437, 96
        %v444 = vpop.permute.xlu0 %443
        %445 = vrot.lane.b32.xlu0 %v438, 96
        %v446 = vpop.permute.xlu0 %445
        %451 = vst.msk [vmem:[%s313] sm:$0xf] %vm426, %v440
        %452 = vst.msk [vmem:[%s313 + $0x4] sm:$0xf] %vm426, %v442
        %453 = vst.msk [vmem:[%s313 + $0x8] sm:$0xf] %vm426, %v444
        %454 = vst.msk [vmem:[%s313 + $0xc] sm:$0xf] %vm426, %v446
        %455 = vrot.lane.b32.xlu0 %v435, 64
        %v456 = vpop.permute.xlu0 %455
        %457 = vrot.lane.b32.xlu0 %v436, 64
        %v458 = vpop.permute.xlu0 %457
        %459 = vrot.lane.b32.xlu0 %v437, 64
        %v460 = vpop.permute.xlu0 %459
        %461 = vrot.lane.b32.xlu0 %v438, 64
        %v462 = vpop.permute.xlu0 %461
        %467 = vst.msk [vmem:[%s320] sm:$0xf] %vm426, %v456
        %468 = vst.msk [vmem:[%s320 + $0x4] sm:$0xf] %vm426, %v458
        %469 = vst.msk [vmem:[%s320 + $0x8] sm:$0xf] %vm426, %v460
        %470 = vst.msk [vmem:[%s320 + $0xc] sm:$0xf] %vm426, %v462
        %s471 = sand.u32 %s141, 1
        %s472 = scalar_lea.sflag [#allocation4], %s471
        %s473 = sand.u32 %s141, 1
        %s474 = smul.addr %s473, 16
        %s475 = scalar_lea.vmem [#allocation7], %s474
        %s476 = sand.u32 %s28, 1
        %s477 = scalar_lea.sflag [#allocation9], %s476
        %s478 = sand.u32 %s169, 1
        %s479 = smul.addr %s478, 16
        %s480 = scalar_lea.vmem [#allocation8], %s479
        %s481 = sand.u32 %s28, 1
        %s482 = scalar_lea.sflag [#allocation9], %s481
        %s483 = sand.u32 %s197, 1
        %s484 = smul.addr %s483, 16
        %s485 = scalar_lea.vmem [#allocation10], %s484
        // Predicated region
        $region45: #{tpu_custom_call.1} parent=35 // pred_check
          %p486 = pneg %p151
        $region46: #{tpu_custom_call.1} parent=35 // pred_check_branch
          %488 = sbr.rel (%p486) target = $region48
        $region47: #{tpu_custom_call.1} parent=35 // pred_region
          %s490 = ssub.s32 256, 256
          %491 = vsyncadd %s472, %s490
          %s492 = smul.addr %s32, 4
          %s493 = sadd.s32 %s33, %s492
          %s494 = smul.addr %s493, 64
          %s495 = scalar_lea.hbm %s4, %s494
          %s496 = sshll.u32 %s475, 4
          %s497 = int_to_ptr.vmem [resolvable:$true] %s496
          %502 = dma.vmem_to_hbm [thread:$0]  %s497, 256, %s495, %s472, 64, 64, 4
        $region48: #{tpu_custom_call.1} parent=35 // pred_fallthru
          _
        // Predicated region
        $region49: #{tpu_custom_call.1} parent=35 // pred_check
          %p503 = pneg %p179
        $region50: #{tpu_custom_call.1} parent=35 // pred_check_branch
          %505 = sbr.rel (%p503) target = $region52
        $region51: #{tpu_custom_call.1} parent=35 // pred_region
          %s507 = ssub.s32 256, 256
          %508 = vsyncadd %s477, %s507
          %s509 = smul.addr %s32, 4
          %s510 = sadd.s32 %s33, %s509
          %s511 = smul.addr %s510, 64
          %s512 = scalar_lea.hbm %s5, %s511
          %s513 = sshll.u32 %s480, 4
          %s514 = int_to_ptr.vmem [resolvable:$true] %s513
          %519 = dma.vmem_to_hbm [thread:$0]  %s514, 256, %s512, %s477, 64, 64, 4
        $region52: #{tpu_custom_call.1} parent=35 // pred_fallthru
          _
        // Predicated region
        $region53: #{tpu_custom_call.1} parent=35 // pred_check
          %p520 = pneg %p207
        $region54: #{tpu_custom_call.1} parent=35 // pred_check_branch
          %522 = sbr.rel (%p520) target = $region56
        $region55: #{tpu_custom_call.1} parent=35 // pred_region
          %s524 = ssub.s32 256, 256
          %525 = vsyncadd %s482, %s524
          %s526 = smul.addr %s32, 4
          %s527 = sadd.s32 %s33, %s526
          %s528 = smul.addr %s527, 64
          %s529 = scalar_lea.hbm %s6, %s528
          %s530 = sshll.u32 %s485, 4
          %s531 = int_to_ptr.vmem [resolvable:$true] %s530
          %536 = dma.vmem_to_hbm [thread:$0]  %s531, 256, %s529, %s482, 64, 64, 4
        $region56: #{tpu_custom_call.1} parent=35 // pred_fallthru
          _
      $region36: #{tpu_custom_call.1} parent=5 // pred_fallthru
        _
      %p537 = scmp.le.s32.totalorder 2, %s23
      // Predicated region
      $region57: #{tpu_custom_call.1} parent=5 // pred_check
        %p538 = pneg %p537
      $region58: #{tpu_custom_call.1} parent=5 // pred_check_branch
        %540 = sbr.rel (%p538) target = $region60
      $region59: #{tpu_custom_call.1} parent=5 // pred_region
        %s541 = ssub.s32 %s23, 2
        // Predicated region
        $region61: #{tpu_custom_call.1} parent=59 // pred_check
          %p542 = pneg %p157
        $region62: #{tpu_custom_call.1} parent=59 // pred_check_branch
          %544 = sbr.rel (%p542) target = $region64
        $region63: #{tpu_custom_call.1} parent=59 // pred_region
          %s545 = sand.u32 %s142, 1
          %s546 = scalar_lea.sflag [#allocation4], %s545
          %s547 = sand.u32 %s142, 1
          %s548 = smul.addr %s547, 16
          %s549 = scalar_lea.vmem [#allocation7], %s548
          %550 = dma.done %s546, 256
        $region64: #{tpu_custom_call.1} parent=59 // pred_fallthru
          _
        // Predicated region
        $region65: #{tpu_custom_call.1} parent=59 // pred_check
          %p551 = pneg %p185
        $region66: #{tpu_custom_call.1} parent=59 // pred_check_branch
          %553 = sbr.rel (%p551) target = $region68
        $region67: #{tpu_custom_call.1} parent=59 // pred_region
          %s554 = sand.u32 %s29, 1
          %s555 = scalar_lea.sflag [#allocation9], %s554
          %s556 = sand.u32 %s170, 1
          %s557 = smul.addr %s556, 16
          %s558 = scalar_lea.vmem [#allocation8], %s557
          %559 = dma.done %s555, 256
        $region68: #{tpu_custom_call.1} parent=59 // pred_fallthru
          _
        // Predicated region
        $region69: #{tpu_custom_call.1} parent=59 // pred_check
          %p560 = pneg %p213
        $region70: #{tpu_custom_call.1} parent=59 // pred_check_branch
          %562 = sbr.rel (%p560) target = $region72
        $region71: #{tpu_custom_call.1} parent=59 // pred_region
          %s563 = sand.u32 %s29, 1
          %s564 = scalar_lea.sflag [#allocation9], %s563
          %s565 = sand.u32 %s198, 1
          %s566 = smul.addr %s565, 16
          %s567 = scalar_lea.vmem [#allocation10], %s566
          %568 = dma.done %s564, 256
        $region72: #{tpu_custom_call.1} parent=59 // pred_fallthru
          _
      $region60: #{tpu_custom_call.1} parent=5 // pred_fallthru
        _
    $region6: #{tpu_custom_call.1} parent=1 // loop_footer
      %s27 = sadd.s32 1, %s23
    $region7: #{tpu_custom_call.1} parent=1 // loop_footer_branch
      %22 = sbr.rel target = $region3
    $region8: #{tpu_custom_call.1} parent=1 // loop_exit
      _
    %569 = vsyncpa [#allocation3], 1
    %s570 = scalar_lea.sflag [#allocation3], 1
    %571 = vsyncpa %s570, 1
    %572 = vsyncpa [#allocation6], 1
    %573 = vsyncpa [#allocation4], 1
    %s574 = scalar_lea.sflag [#allocation4], 1
    %575 = vsyncpa %s574, 1
    %576 = vsyncpa [#allocation9], 1
    %s577 = scalar_lea.sflag [#allocation9], 1
    %578 = vsyncpa %s577, 1

</llo_original>
